<compile_context>
chip_gen: v6e
topology: v6e:2x2x1
jax: 0.10.0
libtpu: 0.0.40
codegen_flags: <defaults>
</compile_context>

<pallas_src>
import functools

import jax
import jax.numpy as jnp
from jax.experimental import pallas as pl
from jax.experimental.pallas import tpu as pltpu

F32 = jnp.float32
BF16 = jnp.bfloat16


def _row_tile(m):
    # Cap at 256: negligible per-step overhead vs 512, and keeps the activation / GELU
    # intermediate footprint comfortable against v7x's 64 MiB physical VMEM.
    for t in (256, 128, 64, 32, 16, 8):
        if m % t == 0:
            return t
    return m


def _inter_tile(i):
    # FFN intermediate-dim chunk (reduction grid axis); keeps Wi/Wo slices and the
    # (tm, ti) GELU intermediate small.
    for t in (512, 256, 128):
        if i % t == 0:
            return t
    return i


def _nbytes(shape, dtype):
    n = 1
    for d in shape:
        n *= int(d)
    return n * jnp.dtype(dtype).itemsize


def _compiler_params(semantics, block_bytes):
    # Explicit scoped-VMEM limit sized from the (double-buffered) block footprint plus
    # margin, clamped to v7x's 64 MiB physical VMEM.  v5e's scoped default is only 16 MiB.
    needed = 2 * block_bytes + (4 << 20)
    return pltpu.CompilerParams(
        dimension_semantics=semantics,
        vmem_limit_bytes=int(min(max(needed, 16 << 20), 64 << 20)))


def _gelu(x):
    # tanh-approx GELU (HF BERT uses erf-GELU; numerical difference is tiny).
    return 0.5 * x * (1.0 + jnp.tanh(0.7978845608028654 * (x + 0.044715 * x * x * x)))


def _ln(x, g, b, eps):
    mu = jnp.mean(x, axis=-1, keepdims=True)
    var = jnp.mean(jnp.square(x - mu), axis=-1, keepdims=True)
    return (x - mu) * jax.lax.rsqrt(var + eps) * g + b


# ---------------------------------------------------------------------------
# Pallas kernels
# ---------------------------------------------------------------------------

def _layernorm_kernel(x_ref, g_ref, b_ref, o_ref, *, eps):
    o_ref[...] = _ln(x_ref[...].astype(F32), g_ref[...], b_ref[...], eps).astype(o_ref.dtype)


def layernorm(x, gamma, beta, eps=1e-12):
    M, H = x.shape
    tm = _row_tile(M)
    bb = _nbytes((tm, H), x.dtype) + 2 * _nbytes((1, H), F32) + _nbytes((tm, H), BF16)
    return pl.pallas_call(
        functools.partial(_layernorm_kernel, eps=eps),
        out_shape=jax.ShapeDtypeStruct((M, H), BF16),
        grid=(M // tm,),
        in_specs=[pl.BlockSpec((tm, H), lambda i: (i, 0)),
                  pl.BlockSpec((1, H), lambda i: (0, 0)),
                  pl.BlockSpec((1, H), lambda i: (0, 0))],
        out_specs=pl.BlockSpec((tm, H), lambda i: (i, 0)),
        compiler_params=_compiler_params(("parallel",), bb),
    )(x, gamma.reshape(1, H), beta.reshape(1, H))


def _matmul_bias_kernel(x_ref, w_ref, b_ref, o_ref):
    o_ref[...] = (jnp.dot(x_ref[...], w_ref[...], preferred_element_type=F32)
                  + b_ref[...]).astype(o_ref.dtype)


def matmul_bias(x, w, b):
    """Fused projection: x @ W + b (bf16 operands, f32 MXU accumulation). Used for QKV."""
    M, K = x.shape
    N = w.shape[1]
    tm = _row_tile(M)
    bb = (_nbytes((tm, K), BF16) + _nbytes((K, N), BF16) + _nbytes((1, N), F32)
          + _nbytes((tm, N), BF16))
    # TODO(synk): pipeline_mode=pl.Buffered(1) on the constant weight block would drop its
    # second VMEM buffer; with bf16 weights the resident footprint is already small.
    return pl.pallas_call(
        _matmul_bias_kernel,
        out_shape=jax.ShapeDtypeStruct((M, N), BF16),
        grid=(M // tm,),
        in_specs=[pl.BlockSpec((tm, K), lambda i: (i, 0)),
                  pl.BlockSpec((K, N), lambda i: (0, 0)),
                  pl.BlockSpec((1, N), lambda i: (0, 0))],
        out_specs=pl.BlockSpec((tm, N), lambda i: (i, 0)),
        compiler_params=_compiler_params(("parallel",), bb),
    )(x, w, b.reshape(1, N))


def _attention_kernel(q_ref, k_ref, v_ref, m_ref, o_ref):
    # 1/sqrt(head_dim) is folded into Wq/bq at parameter-build time (zero runtime cost).
    s = jnp.dot(q_ref[...], k_ref[...].T, preferred_element_type=F32) + m_ref[...]
    s = s - jnp.max(s, axis=-1, keepdims=True)
    p = jnp.exp(s)
    p = p * pl.reciprocal(jnp.sum(p, axis=-1, keepdims=True), approx=True)   # EUP slot
    o_ref[...] = jnp.dot(p.astype(v_ref.dtype), v_ref[...],
                         preferred_element_type=F32).astype(o_ref.dtype)


def attention(qkv, mask_add, *, batch, seq, n_heads, head_dim):
    """Per-(batch, head) attention.  Q/K/V are read straight out of the fused [M, 3H] qkv
    buffer via column-offset BlockSpecs, and the context is written lane-dense into [M, H]
    with head h at lane offset h*head_dim — no XLA-side split/transpose HBM round trips."""
    H = n_heads * head_dim
    M = batch * seq
    bb = (4 * _nbytes((seq, head_dim), BF16) + _nbytes((1, seq), F32)
          + _nbytes((seq, seq), F32))
    # TODO(synk): for long sequences add a KV grid axis (flash-style online softmax, KV tile
    # >= 256 for the 256-wide v6e/v7x MXU); at BERT S<=512 one (S,S) score tile fits VMEM.
    # TODO(synk): when head_dim < 128 (e.g. BERT-base Dh=64), process 128//head_dim heads per
    # grid step so the lane dimension stays 128-aligned (unmasked vst).
    return pl.pallas_call(
        _attention_kernel,
        out_shape=jax.ShapeDtypeStruct((M, H), BF16),
        grid=(batch, n_heads),
        in_specs=[
            pl.BlockSpec((seq, head_dim), lambda b, h: (b, h)),                 # Q
            pl.BlockSpec((seq, head_dim), lambda b, h: (b, n_heads + h)),       # K
            pl.BlockSpec((seq, head_dim), lambda b, h: (b, 2 * n_heads + h)),   # V
            pl.BlockSpec((None, 1, seq), lambda b, h: (b, 0, 0)),               # additive mask
        ],
        out_specs=pl.BlockSpec((seq, head_dim), lambda b, h: (b, h)),
        compiler_params=_compiler_params(("parallel", "parallel"), bb),
    )(qkv, qkv, qkv, mask_add)


def _proj_add_ln_kernel(x_ref, res_ref, w_ref, b_ref, g_ref, beta_ref, o_ref, *, eps):
    y = jnp.dot(x_ref[...], w_ref[...], preferred_element_type=F32) + b_ref[...]
    y = y + res_ref[...].astype(F32)
    o_ref[...] = _ln(y, g_ref[...], beta_ref[...], eps).astype(o_ref.dtype)


def proj_add_layernorm(x, res, w, b, gamma, beta, eps=1e-12):
    """Fused: (x @ W + b) + residual -> LayerNorm."""
    M, K = x.shape
    H = w.shape[1]
    tm = _row_tile(M)
    bb = (_nbytes((tm, K), BF16) + _nbytes((tm, H), BF16) + _nbytes((K, H), BF16)
          + 3 * _nbytes((1, H), F32) + _nbytes((tm, H), BF16))
    # TODO(synk): input_output_aliases could alias the residual buffer to the output to save
    # one HBM activation allocation per fused block.
    return pl.pallas_call(
        functools.partial(_proj_add_ln_kernel, eps=eps),
        out_shape=jax.ShapeDtypeStruct((M, H), BF16),
        grid=(M // tm,),
        in_specs=[pl.BlockSpec((tm, K), lambda i: (i, 0)),
                  pl.BlockSpec((tm, H), lambda i: (i, 0)),
                  pl.BlockSpec((K, H), lambda i: (0, 0)),
                  pl.BlockSpec((1, H), lambda i: (0, 0)),
                  pl.BlockSpec((1, H), lambda i: (0, 0)),
                  pl.BlockSpec((1, H), lambda i: (0, 0))],
        out_specs=pl.BlockSpec((tm, H), lambda i: (i, 0)),
        compiler_params=_compiler_params(("parallel",), bb),
    )(x, res, w, b.reshape(1, H), gamma.reshape(1, H), beta.reshape(1, H))


def _ffn_add_ln_kernel(x_ref, wi_ref, bi_ref, wo_ref, bo_ref, g_ref, beta_ref, o_ref,
                       acc_ref, *, eps):
    j = pl.program_id(1)

    @pl.when(j == 0)
    def _():
        acc_ref[...] = jnp.zeros_like(acc_ref)

    x = x_ref[...]
    h = _gelu(jnp.dot(x, wi_ref[...], preferred_element_type=F32) + bi_ref[...])
    acc_ref[...] += jnp.dot(h.astype(BF16), wo_ref[...], preferred_element_type=F32)

    @pl.when(j == pl.num_programs(1) - 1)
    def _():
        y = acc_ref[...] + bo_ref[...] + x.astype(F32)
        o_ref[...] = _ln(y, g_ref[...], beta_ref[...], eps).astype(o_ref.dtype)


def ffn_add_layernorm(x, wi, bi, wo, bo, gamma, beta, eps=1e-12):
    """Fused FFN block: GELU(x @ Wi + bi) @ Wo + bo + x -> LayerNorm, with the intermediate
    dim chunked over a reduction grid axis into an f32 VMEM accumulator (no full Wi/Wo
    residency, bounded GELU intermediate)."""
    M, H = x.shape
    I = wi.shape[1]
    tm = _row_tile(M)
    ti = _inter_tile(I)
    bb = (_nbytes((tm, H), BF16) + _nbytes((H, ti), BF16) + _nbytes((1, ti), F32)
          + _nbytes((ti, H), BF16) + 3 * _nbytes((1, H), F32) + _nbytes((tm, H), BF16)
          + _nbytes((tm, H), F32) + _nbytes((tm, ti), F32))
    return pl.pallas_call(
        functools.partial(_ffn_add_ln_kernel, eps=eps),
        out_shape=jax.ShapeDtypeStruct((M, H), BF16),
        grid=(M // tm, I // ti),
        in_specs=[pl.BlockSpec((tm, H), lambda i, j: (i, 0)),
                  pl.BlockSpec((H, ti), lambda i, j: (0, j)),
                  pl.BlockSpec((1, ti), lambda i, j: (0, j)),
                  pl.BlockSpec((ti, H), lambda i, j: (j, 0)),
                  pl.BlockSpec((1, H), lambda i, j: (0, 0)),
                  pl.BlockSpec((1, H), lambda i, j: (0, 0)),
                  pl.BlockSpec((1, H), lambda i, j: (0, 0))],
        out_specs=pl.BlockSpec((tm, H), lambda i, j: (i, 0)),
        scratch_shapes=[pltpu.VMEM((tm, H), F32)],
        compiler_params=_compiler_params(("parallel", "arbitrary"), bb),
    )(x, wi, bi.reshape(1, I), wo, bo.reshape(1, H), gamma.reshape(1, H), beta.reshape(1, H))


def _pool_cls_softmax_kernel(cls_ref, pw_ref, pb_ref, drop_ref, cw_ref, cb_ref, o_ref):
    pooled = jnp.tanh(jnp.dot(cls_ref[...], pw_ref[...],
                              preferred_element_type=F32) + pb_ref[...])
    pooled = pooled * drop_ref[...]                      # pre-scaled dropout keep-mask (f32)
    logits = jnp.dot(pooled.astype(cw_ref.dtype), cw_ref[...],
                     preferred_element_type=F32) + cb_ref[...]
    logits = logits - jnp.max(logits, axis=-1, keepdims=True)
    e = jnp.exp(logits)
    # Exact f32 divide here (not the approx EUP reciprocal) so the returned distribution is
    # normalized to f32 precision, matching torch.softmax.
    o_ref[...] = (e / jnp.sum(e, axis=-1, keepdims=True)).astype(o_ref.dtype)


def pool_classify_softmax(cls_tok, pool_w, pool_b, drop_mask, cls_w, cls_b):
    """Fused epilogue: pooler(tanh) -> dropout mask -> classifier -> softmax."""
    B, H = cls_tok.shape
    L = cls_w.shape[1]
    return pl.pallas_call(
        _pool_cls_softmax_kernel,
        out_shape=jax.ShapeDtypeStruct((B, L), F32),
    )(cls_tok, pool_w, pool_b.reshape(1, H), drop_mask, cls_w, cls_b.reshape(1, L))


# ---------------------------------------------------------------------------
# Deterministic parameter init (synthetic; mirrors BertModel + Linear shapes, bf16 weights)
# ---------------------------------------------------------------------------

def init_params(key, cfg, num_labels):
    H = cfg["hidden_size"]
    I = cfg["intermediate_size"]
    Dh = H // cfg["num_attention_heads"]
    scale = 1.0 / (Dh ** 0.5)

    def nrm(k, shape):
        return 0.02 * jax.random.normal(k, shape, dtype=F32)

    keys = jax.random.split(key, 8 + cfg["num_hidden_layers"])
    params = {
        "word_emb": nrm(keys[0], (cfg["vocab_size"], H)).astype(BF16),
        "pos_emb": nrm(keys[1], (cfg["max_position_embeddings"], H)).astype(BF16),
        "type_emb": nrm(keys[2], (cfg["type_vocab_size"], H)).astype(BF16),
        "emb_ln_g": jnp.ones((H,), F32),
        "emb_ln_b": jnp.zeros((H,), F32),
        "pool_w": nrm(keys[3], (H, H)).astype(BF16),
        "pool_b": jnp.zeros((H,), F32),
        "cls_w": nrm(keys[4], (H, num_labels)).astype(BF16),
        "cls_b": jnp.zeros((num_labels,), F32),
        "layers": [],
    }
    for li in range(cfg["num_hidden_layers"]):
        lk = jax.random.split(keys[8 + li], 6)
        # Q/K/V weights pre-concatenated -> one fused MXU pass per layer; the 1/sqrt(Dh)
        # attention scale is folded into Wq (and the zero bq) at parameter-build time.
        wqkv = jnp.concatenate([nrm(lk[0], (H, H)) * scale,
                                nrm(lk[1], (H, H)),
                                nrm(lk[2], (H, H))], axis=1).astype(BF16)
        params["layers"].append({
            "wqkv": wqkv, "bqkv": jnp.zeros((3 * H,), F32),
            "wo": nrm(lk[3], (H, H)).astype(BF16), "bo": jnp.zeros((H,), F32),
            "ln1_g": jnp.ones((H,), F32), "ln1_b": jnp.zeros((H,), F32),
            "wi": nrm(lk[4], (H, I)).astype(BF16), "bi": jnp.zeros((I,), F32),
            "wo2": nrm(lk[5], (I, H)).astype(BF16), "bo2": jnp.zeros((H,), F32),
            "ln2_g": jnp.ones((H,), F32), "ln2_b": jnp.zeros((H,), F32),
        })
    return params


# ---------------------------------------------------------------------------
# Forward pass (glue in plain JAX, compute in Pallas kernels)
# ---------------------------------------------------------------------------

def bert_classifier_forward(params, cfg, input_ids, attention_mask, token_type_ids,
                            is_train=True, dropout_rng=None, dropout_rate=0.5):
    B, S = input_ids.shape
    H = cfg["hidden_size"]
    nH = cfg["num_attention_heads"]
    Dh = H // nH

    # --- embeddings (gathers are glue; LayerNorm is a Pallas kernel) ---
    emb = (params["word_emb"][input_ids].astype(F32)
           + params["pos_emb"][jnp.arange(S)][None, :, :].astype(F32)
           + params["type_emb"][token_type_ids].astype(F32))
    x = layernorm(emb.reshape(B * S, H), params["emb_ln_g"], params["emb_ln_b"])   # bf16
    # TODO(synk): BERT-internal dropouts (embedding/attention/hidden) use eval semantics;
    # only BertClassifier's explicit classifier-level dropout is applied below.

    # Additive mask kept in f32 (the -1e9 bias must not be formed in bf16).
    mask_add = ((1.0 - attention_mask.astype(F32)) * -1e9).reshape(B, 1, S)

    # --- transformer encoder layers (4 Pallas kernels per layer, no XLA head transposes) ---
    for layer in params["layers"]:
        qkv = matmul_bias(x, layer["wqkv"], layer["bqkv"])                        # [M, 3H]
        ctx = attention(qkv, mask_add, batch=B, seq=S, n_heads=nH, head_dim=Dh)   # [M, H]
        x = proj_add_layernorm(ctx, x, layer["wo"], layer["bo"],
                               layer["ln1_g"], layer["ln1_b"])
        x = ffn_add_layernorm(x, layer["wi"], layer["bi"], layer["wo2"], layer["bo2"],
                              layer["ln2_g"], layer["ln2_b"])

    # --- classifier head: pooler(tanh) -> dropout(0.5) -> linear -> softmax, fused ---
    cls_tok = x.reshape(B, S, H)[:, 0, :]
    if is_train:
        assert dropout_rate < 1.0, "dropout rate must be < 1"
        rng = dropout_rng if dropout_rng is not None else jax.random.PRNGKey(0)
        keep = jax.random.bernoulli(rng, 1.0 - dropout_rate, (B, H)).astype(F32)
        drop_mask = keep * (1.0 / (1.0 - dropout_rate))
    else:
        drop_mask = jnp.ones((B, H), F32)

    return pool_classify_softmax(cls_tok, params["pool_w"], params["pool_b"],
                                 drop_mask, params["cls_w"], params["cls_b"])


# ---------------------------------------------------------------------------

if __name__ == "__main__":
    # Small but lane-aligned toy config: head_dim = 128 so each per-head Q/K/V/context block
    # is exactly one 128-lane tile wide (the layout this kernel targets at real sizes).
    cfg = dict(
        vocab_size=64,
        hidden_size=256,
        num_hidden_layers=2,
        num_attention_heads=2,
        intermediate_size=512,
        max_position_embeddings=16,
        type_vocab_size=2,
    )
    num_labels = 3
    B, S = 2, 8

    key = jax.random.PRNGKey(0)
    k_param, k_ids, k_drop = jax.random.split(key, 3)
    params = init_params(k_param, cfg, num_labels)

    input_ids = jax.random.randint(k_ids, (B, S), 0, cfg["vocab_size"], dtype=jnp.int32)
    attention_mask = jnp.array([[1, 1, 1, 1, 1, 1, 1, 1],
                                [1, 1, 1, 1, 1, 1, 0, 0]], dtype=jnp.int32)
    token_type_ids = jnp.array([[0, 0, 0, 0, 1, 1, 1, 1],
                                [0, 0, 0, 0, 0, 1, 1, 1]], dtype=jnp.int32)

    probs = bert_classifier_forward(params, cfg, input_ids, attention_mask,
                                    token_type_ids, is_train=True, dropout_rng=k_drop)
    probs = jax.block_until_ready(probs)

    assert probs.shape == (B, num_labels)
    assert bool(jnp.all(jnp.isfinite(probs)))
    assert bool(jnp.allclose(jnp.sum(probs, axis=1), 1.0, atol=1e-5))
    print("KERNEL_OK")
</pallas_src>

<mosaic_0001>
module attributes {stable_mosaic.version = 11 : i64} {
  func.func @_layernorm_kernel(%arg0: i32, %arg1: memref<16x256xf32, #tpu.memory_space<vmem>>, %arg2: memref<1x256xf32, #tpu.memory_space<vmem>>, %arg3: memref<1x256xf32, #tpu.memory_space<vmem>>, %arg4: memref<16x256xbf16, #tpu.memory_space<vmem>>) attributes {dimension_semantics = [#tpu.dimension_semantics<parallel>], iteration_bounds = array<i64: 1>, scalar_prefetch = 0 : i64, scratch_operands = 0 : i64, tpu.core_type = #tpu.core_type<tc>, window_params = [{transform_indices = @transform_0, window_bounds = array<i64: 16, 256>}, {pipeline_mode = #tpu.pipeline_mode<synchronous>, transform_indices = @transform_1, window_bounds = array<i64: 1, 256>}, {pipeline_mode = #tpu.pipeline_mode<synchronous>, transform_indices = @transform_2, window_bounds = array<i64: 1, 256>}, {transform_indices = @transform_3, window_bounds = array<i64: 16, 256>}]} {
    %c0 = arith.constant 0 : index
    %c0_0 = arith.constant 0 : index
    %0 = vector.load %arg1[%c0, %c0_0] : memref<16x256xf32, #tpu.memory_space<vmem>>, vector<16x256xf32>
    %c0_1 = arith.constant 0 : index
    %c0_2 = arith.constant 0 : index
    %1 = vector.load %arg2[%c0_1, %c0_2] : memref<1x256xf32, #tpu.memory_space<vmem>>, vector<1x256xf32>
    %c0_3 = arith.constant 0 : index
    %c0_4 = arith.constant 0 : index
    %2 = vector.load %arg3[%c0_3, %c0_4] : memref<1x256xf32, #tpu.memory_space<vmem>>, vector<1x256xf32>
    %cst = arith.constant dense<0.000000e+00> : vector<16xf32>
    %3 = vector.multi_reduction <add>, %0, %cst [1] : vector<16x256xf32> to vector<16xf32>
    %4 = vector.shape_cast %3 : vector<16xf32> to vector<16x1xf32>
    %cst_5 = arith.constant 2.560000e+02 : f32
    %5 = vector.broadcast %cst_5 : f32 to vector<16x1xf32>
    %6 = arith.divf %4, %5 : vector<16x1xf32>
    %7 = vector.broadcast %6 : vector<16x1xf32> to vector<16x256xf32>
    %8 = arith.subf %0, %7 : vector<16x256xf32>
    %9 = arith.mulf %8, %8 : vector<16x256xf32>
    %cst_6 = arith.constant dense<0.000000e+00> : vector<16xf32>
    %10 = vector.multi_reduction <add>, %9, %cst_6 [1] : vector<16x256xf32> to vector<16xf32>
    %11 = vector.shape_cast %10 : vector<16xf32> to vector<16x1xf32>
    %cst_7 = arith.constant 2.560000e+02 : f32
    %12 = vector.broadcast %cst_7 : f32 to vector<16x1xf32>
    %13 = arith.divf %11, %12 : vector<16x1xf32>
    %14 = vector.broadcast %6 : vector<16x1xf32> to vector<16x256xf32>
    %15 = arith.subf %0, %14 : vector<16x256xf32>
    %cst_8 = arith.constant 9.99999996E-13 : f32
    %16 = vector.broadcast %cst_8 : f32 to vector<16x1xf32>
    %17 = arith.addf %13, %16 : vector<16x1xf32>
    %18 = math.rsqrt %17 : vector<16x1xf32>
    %19 = vector.broadcast %18 : vector<16x1xf32> to vector<16x256xf32>
    %20 = arith.mulf %15, %19 : vector<16x256xf32>
    %21 = vector.broadcast %1 : vector<1x256xf32> to vector<16x256xf32>
    %22 = arith.mulf %20, %21 : vector<16x256xf32>
    %23 = vector.broadcast %2 : vector<1x256xf32> to vector<16x256xf32>
    %24 = arith.addf %22, %23 : vector<16x256xf32>
    %25 = arith.truncf %24 : vector<16x256xf32> to vector<16x256xbf16>
    %c0_9 = arith.constant 0 : index
    %c0_10 = arith.constant 0 : index
    %26 = vector.load %arg4[%c0_9, %c0_10] : memref<16x256xbf16, #tpu.memory_space<vmem>>, vector<16x256xbf16>
    tpu.vector_store %arg4[%c0_9, %c0_10], %25 {strides = array<i32>} : memref<16x256xbf16, #tpu.memory_space<vmem>>, vector<16x256xbf16>,
    return
  }
  func.func @transform_0(%arg0: i32) -> (i32, i32) {
    %c0_i32 = arith.constant 0 : i32
    %c0_i32_0 = arith.constant 0 : i32
    return %arg0, %c0_i32 : i32, i32
  }
  func.func @transform_1(%arg0: i32) -> (i32, i32) {
    %c0_i32 = arith.constant 0 : i32
    %c0_i32_0 = arith.constant 0 : i32
    %c0_i32_1 = arith.constant 0 : i32
    return %c0_i32, %c0_i32_0 : i32, i32
  }
  func.func @transform_2(%arg0: i32) -> (i32, i32) {
    %c0_i32 = arith.constant 0 : i32
    %c0_i32_0 = arith.constant 0 : i32
    %c0_i32_1 = arith.constant 0 : i32
    return %c0_i32, %c0_i32_0 : i32, i32
  }
  func.func @transform_3(%arg0: i32) -> (i32, i32) {
    %c0_i32 = arith.constant 0 : i32
    %c0_i32_0 = arith.constant 0 : i32
    return %arg0, %c0_i32 : i32, i32
  }
}

</mosaic_0001>

<llo_original>
// kernel: tpu_custom_call.1
$region0: #{tpu_custom_call.1}
  #allocation0 [shape = 'u32[]', space=smem, size = 0x4, offset = 0x4, fixed_abs, tag = 'smem constant byte address 0x4 - core index']
  #allocation1 [shape = 'u32[144,128]{1,0:T(1,128)}', space=vmem, size = 0x12000, scoped, tag = 'internal scratch']
  %s0 = inlined_call_operand.hbm [shape: f32[16,256], index: 0, kind: input, shape index: {}]
  %s1 = inlined_call_operand.hbm [shape: f32[1,256], index: 1, kind: input, shape index: {}]
  %s2 = inlined_call_operand.vmem [shape: f32[1,256], index: 2, kind: input, shape index: {}]
  %s3 = inlined_call_operand.hbm [shape: bf16[16,256], index: 3, kind: output, shape index: {}]
  %s4 = sld [smem:[#allocation0]]
  $region30: #{tpu_custom_call.1} parent=0
    _
  %s6 = ssub.s32 1, %s4
  %s7 = scalar_select 0, %s6, %s4
  $region1: #{tpu_custom_call.1} parent=0
    #allocation2 [shape = 'u8[16384]{0}', space=vmem, size = 0x4000, scoped, tag = 'input window, operand 0, single buffered']
    #allocation3 [shape = 's32[1]{0}', space=sflag, size = 0x4, scoped, tag = 'scoped memory for tpu_custom_call.1']
    #allocation4 [shape = 's32[1]{0}', space=sflag, size = 0x4, scoped, tag = 'scoped memory for tpu_custom_call.1']
    #allocation5 [shape = 'u8[1024]{0}', space=vmem, size = 0x400, scoped, tag = 'input window, operand 1, single buffered']
    #allocation6 [shape = 's32[1]{0}', space=sflag, size = 0x4, scoped, tag = 'scoped memory for tpu_custom_call.1']
    #allocation7 [shape = 'u8[8192]{0}', space=vmem, size = 0x2000, scoped, tag = 'output window, operand 0, single buffered']
    %8 = vsyncpa [#allocation3], 0
    %9 = vsyncpa [#allocation6], 0
    %10 = vsyncpa [#allocation4], 0
    // Predicated region
    $region2: #{tpu_custom_call.1} parent=1 // pred_check
      _
    $region3: #{tpu_custom_call.1} parent=1 // pred_check_branch
      %12 = sbr.rel (0) target = $region5
    $region4: #{tpu_custom_call.1} parent=1 // pred_region
      %s14 = ssub.s32 512, 512
      %15 = vsyncadd [#allocation3], %s14
      %s16 = sshll.u32 [#allocation2], 4
      %s17 = int_to_ptr.vmem [resolvable:$true] %s16
      %22 = dma.hbm_to_vmem [thread:$0]  %s0, 512, %s17, [#allocation3], 256, 256, 16
    $region5: #{tpu_custom_call.1} parent=1 // pred_fallthru
      _
    // Predicated region
    $region6: #{tpu_custom_call.1} parent=1 // pred_check
      _
    $region7: #{tpu_custom_call.1} parent=1 // pred_check_branch
      %24 = sbr.rel (0) target = $region9
    $region8: #{tpu_custom_call.1} parent=1 // pred_region
      %s26 = ssub.s32 32, 32
      %27 = vsyncadd [#allocation6], %s26
      %s29 = sshll.u32 [#allocation5], 4
      %s30 = int_to_ptr.vmem [resolvable:$true] %s29
      %32 = dma.hbm_to_vmem [thread:$0]  %s1, 32, %s30, [#allocation6]
    $region9: #{tpu_custom_call.1} parent=1 // pred_fallthru
      _
    // Predicated region
    $region10: #{tpu_custom_call.1} parent=1 // pred_check
      _
    $region11: #{tpu_custom_call.1} parent=1 // pred_check_branch
      %34 = sbr.rel (0) target = $region13
    $region12: #{tpu_custom_call.1} parent=1 // pred_region
      _
    $region13: #{tpu_custom_call.1} parent=1 // pred_fallthru
      _
    // Predicated region
    $region14: #{tpu_custom_call.1} parent=1 // pred_check
      _
    $region15: #{tpu_custom_call.1} parent=1 // pred_check_branch
      %36 = sbr.rel (0) target = $region17
    $region16: #{tpu_custom_call.1} parent=1 // pred_region
      %37 = dma.done [#allocation3], 512
    $region17: #{tpu_custom_call.1} parent=1 // pred_fallthru
      _
    // Predicated region
    $region18: #{tpu_custom_call.1} parent=1 // pred_check
      _
    $region19: #{tpu_custom_call.1} parent=1 // pred_check_branch
      %39 = sbr.rel (0) target = $region21
    $region20: #{tpu_custom_call.1} parent=1 // pred_region
      %40 = dma.done [#allocation6], 32
    $region21: #{tpu_custom_call.1} parent=1 // pred_fallthru
      _
    %v41 = vld [vmem:[#allocation2] sm:$0xff]
    %v42 = vld [vmem:[#allocation2 + $0x8] sm:$0xff]
    %v43 = vld [vmem:[#allocation2 + $0x10] sm:$0xff]
    %v44 = vld [vmem:[#allocation2 + $0x18] sm:$0xff]
    %v45 = vld [vmem:[#allocation5] sm:$0x3]
    %v46 = vld [vmem:[%s2] sm:$0x3]
    %v47 = vadd.f32 %v41, %v42
    %48 = vadd.xlane.f32.xlu0 %v47
    %v49 = vpop.xlane.xlu0 %48
    %v50 = vadd.f32 %v43, %v44
    %51 = vadd.xlane.f32.xlu0 %v50
    %v52 = vpop.xlane.xlu0 %51
    %v53 = vrcp.pop 256.0
    %v54 = vmul.f32 %v49, %v53
    %v55 = vmul.f32 %v52, %v53
    %v56 = vsub.f32 %v41, %v54
    %v57 = vsub.f32 %v42, %v54
    %v58 = vsub.f32 %v43, %v55
    %v59 = vsub.f32 %v44, %v55
    %v60 = vmul.f32 %v56, %v56
    %v61 = vmul.f32 %v57, %v57
    %v62 = vmul.f32 %v58, %v58
    %v63 = vmul.f32 %v59, %v59
    %v64 = vadd.f32 %v60, %v61
    %65 = vadd.xlane.f32.xlu0 %v64
    %v66 = vpop.xlane.xlu0 %65
    %v67 = vadd.f32 %v62, %v63
    %68 = vadd.xlane.f32.xlu0 %v67
    %v69 = vpop.xlane.xlu0 %68
    %v70 = vmul.f32 %v66, %v53
    %v71 = vmul.f32 %v69, %v53
    %v72 = vadd.f32 %v70, 1e-12
    %v73 = vadd.f32 %v71, 1e-12
    %v74 = vrsqrt.pop %v72
    %v75 = vrsqrt.pop %v73
    %v76 = vmul.f32 %v56, %v74
    %v77 = vmul.f32 %v57, %v74
    %v78 = vmul.f32 %v58, %v75
    %v79 = vmul.f32 %v59, %v75
    %v81 = vlaneseq
    %v82 = vshrl.u32 %v81, 7
    %v83 = vsub.s32 0, %v82
    %v84 = vrot.slane %v45, %v83
    %v85 = vlaneseq
    %v86 = vshrl.u32 %v85, 7
    %v87 = vsub.s32 1, %v86
    %v88 = vrot.slane %v45, %v87
    %v91 = vmul.f32 %v76, %v84
    %v92 = vmul.f32 %v77, %v88
    %v93 = vmul.f32 %v78, %v84
    %v94 = vmul.f32 %v79, %v88
    %v96 = vlaneseq
    %v97 = vshrl.u32 %v96, 7
    %v98 = vsub.s32 0, %v97
    %v99 = vrot.slane %v46, %v98
    %v100 = vlaneseq
    %v101 = vshrl.u32 %v100, 7
    %v102 = vsub.s32 1, %v101
    %v103 = vrot.slane %v46, %v102
    %v106 = vadd.f32 %v91, %v99
    %v107 = vadd.f32 %v92, %v103
    %v108 = vadd.f32 %v93, %v99
    %v109 = vadd.f32 %v94, %v103
    %v110 = vpack.c.bf16 %v108, %v106
    %v111 = vpack.c.bf16 %v109, %v107
    %v114 = vunpack.c.l.b16 %v110
    %v115 = vunpack.c.l.b16 %v111
    %v116 = vunpack.c.h.b16 %v110
    %v117 = vunpack.c.h.b16 %v111
    %v118 = vpack.c.b16 %v115, %v114
    %v119 = vpack.c.b16 %v117, %v116
    %122 = vst [vmem:[#allocation7] sm:$0xff] %v118
    %123 = vst [vmem:[#allocation7 + $0x8] sm:$0xff] %v119
    // Predicated region
    $region22: #{tpu_custom_call.1} parent=1 // pred_check
      _
    $region23: #{tpu_custom_call.1} parent=1 // pred_check_branch
      %125 = sbr.rel (0) target = $region25
    $region24: #{tpu_custom_call.1} parent=1 // pred_region
      %s127 = ssub.s32 256, 256
      %128 = vsyncadd [#allocation4], %s127
      %s129 = sshll.u32 [#allocation7], 4
      %s130 = int_to_ptr.vmem [resolvable:$true] %s129
      %135 = dma.vmem_to_hbm [thread:$0]  %s130, 256, %s3, [#allocation4], 128, 128, 8
    $region25: #{tpu_custom_call.1} parent=1 // pred_fallthru
      _
    // Predicated region
    $region26: #{tpu_custom_call.1} parent=1 // pred_check
      _
    $region27: #{tpu_custom_call.1} parent=1 // pred_check_branch
      %137 = sbr.rel (0) target = $region29
    $region28: #{tpu_custom_call.1} parent=1 // pred_region
      %138 = dma.done [#allocation4], 256
    $region29: #{tpu_custom_call.1} parent=1 // pred_fallthru
      _
    %139 = vsyncpa [#allocation3], 1
    %140 = vsyncpa [#allocation6], 1
    %141 = vsyncpa [#allocation4], 1

</llo_original>
